<compile_context>
chip_gen: v5e
topology: v5e:2x2
jax: 0.10.0
libtpu: 0.0.40
codegen_flags: <defaults>
</compile_context>

<pallas_src>
import jax
import jax.numpy as jnp
from jax.experimental import pallas as pl
from jax.experimental.pallas import tpu as pltpu


def _round_up(x, m):
    return (x + m - 1) // m * m


def _graph_attn_kernel(deg_ref, node_ref, neigh_ref, emb_ref, wn_ref, wb_ref,
                       bias_ref, sumexp_ref, expkf_ref, redk_ref, out_ref):
    tm = node_ref.shape[0]
    n_emb = emb_ref.shape[0]

    # --- structural encoding fused in-kernel: one_hot(deg) @ emb_table (MXU)
    deg = deg_ref[...]                                               # (tm, 1) i32
    eidx = jax.lax.broadcasted_iota(jnp.int32, (tm, n_emb), 1)
    onehot = (eidx == deg).astype(jnp.float32)                       # (tm, n_emb)
    struct = jnp.dot(onehot, emb_ref[...],
                     preferred_element_type=jnp.float32)             # (tm, F)

    enh = node_ref[...].astype(jnp.float32) + struct                 # (tm, F)
    neigh = neigh_ref[...].astype(jnp.float32)                       # (tm, K*F) lane-dense

    # --- attention scores for every (k, h), lane layout k*H + h (all MXU)
    s = (jnp.dot(neigh, wb_ref[...], preferred_element_type=jnp.float32)
         + jnp.dot(enh, wn_ref[...], preferred_element_type=jnp.float32)
         + bias_ref[...])                                            # (tm, K*H)

    # --- softmax over K per head; per-row max is constant per (m, h) so the
    #     per-head softmax is unchanged, and every op runs lane-dense
    s = s - jnp.max(s, axis=1, keepdims=True)
    e = jnp.exp(s)                                                   # (tm, K*H)

    # denominator expanded straight to feature layout: denom_f[m, f] = sum_k e[m, k, f//D]
    denom_f = jnp.dot(e, sumexp_ref[...],
                      preferred_element_type=jnp.float32)            # (tm, F)

    # numerator: expand e across head_dim (0/1 block-diag matmul), multiply by
    # the lane-dense neighbor slab, reduce over K with a 0/1 (K*F, F) matmul
    e_kf = jnp.dot(e, expkf_ref[...],
                   preferred_element_type=jnp.float32)               # (tm, K*F)
    agg = jnp.dot(e_kf * neigh, redk_ref[...],
                  preferred_element_type=jnp.float32)                # (tm, F)

    # exact reciprocal (review: avoid approx= for tighter parity); single
    # lane-contiguous store for the whole tile
    out_ref[...] = (agg * pl.reciprocal(denom_f)).astype(out_ref.dtype)


def structural_graph_transformer(node_features, neighbor_features, degrees,
                                 emb_table, attn_w, attn_b, *, num_heads,
                                 tile_m=1024):
    """node_features (B,N,F), neighbor_features (B,N,K,F), degrees (B,N) int.

    attn_w (H, 2*D) stacks each head's Linear(2D -> 1) weight
    ([:D] node part, [D:] neighbor part); attn_b (H,) are the biases.
    """
    B, N, F = node_features.shape
    K = neighbor_features.shape[2]
    H = num_heads
    assert F % H == 0
    D = F // H
    M = B * N
    n_emb = emb_table.shape[0]
    f32 = jnp.float32

    # --- lane-dense row-major views (metadata-only reshapes, no copies)
    node = node_features.reshape(M, F)
    neigh = neighbor_features.reshape(M, K * F)          # K folded onto lanes
    deg = jnp.clip(degrees.reshape(M, 1), 0, n_emb - 1).astype(jnp.int32)

    # --- tile selection: balanced tiles, no full-tensor padding, grid >= 2 so
    #     both v7x TensorCores get work (partial last block handled by Pallas)
    m8 = _round_up(M, 8)
    ntiles = 1 if m8 <= 8 else max(2, pl.cdiv(m8, tile_m))
    tile = _round_up(pl.cdiv(m8, ntiles), 8)
    grid = (pl.cdiv(M, tile),)

    # --- pack the per-head Linear(2D -> 1) params into MXU-friendly constants
    w_node = attn_w[:, :D].astype(f32)                               # (H, D)
    w_nb = attn_w[:, D:].astype(f32)                                 # (H, D)
    head_expand = jnp.repeat(jnp.eye(H, dtype=f32), D, axis=1)       # (H, F): [h, h'D+d]=(h==h')
    base_n = (head_expand * w_node.reshape(-1)[None, :]).T           # (F, H)
    base_b = (head_expand * w_nb.reshape(-1)[None, :]).T             # (F, H)
    eye_k = jnp.eye(K, dtype=f32)
    wn_big = jnp.tile(base_n, (1, K))                                # (F, K*H)
    wb_big = jnp.kron(eye_k, base_b)                                 # (K*F, K*H) block-diag
    bias_kh = jnp.tile(attn_b.reshape(1, H).astype(f32), (1, K))     # (1, K*H)
    sum_expand = jnp.tile(head_expand, (K, 1))                       # (K*H, F)
    expand_kf = jnp.kron(eye_k, head_expand)                         # (K*H, K*F)
    reduce_k = jnp.tile(jnp.eye(F, dtype=f32), (K, 1))               # (K*F, F)

    # emb table padded to a sublane multiple (padded rows never selected,
    # degrees are clamped above)
    n_emb_pad = _round_up(n_emb, 8)
    emb_pad = jnp.zeros((n_emb_pad, F), f32).at[:n_emb].set(emb_table.astype(f32))

    # --- explicit VMEM budget: double-buffered streams + constants + f32
    #     intermediates headroom (kept well under v7x's 64 MiB / v5e defaults)
    row_bytes = (K * F + F + 128 + 128) * 4      # neigh + node + deg/out (lane-padded)
    const_bytes = 4 * (n_emb_pad * F + F * K * H + K * F * K * H + K * H
                       + K * H * F + K * H * K * F + K * F * F)
    vmem_est = 2 * tile * row_bytes + 2 * const_bytes + 4 * tile * K * F * 4
    vmem_limit = int(min(40 << 20, max(24 << 20, 2 * vmem_est)))

    out = pl.pallas_call(
        _graph_attn_kernel,
        out_shape=jax.ShapeDtypeStruct((M, F), node_features.dtype),
        grid_spec=pltpu.PrefetchScalarGridSpec(
            num_scalar_prefetch=0,
            grid=grid,
            in_specs=[
                pl.BlockSpec((tile, 1), lambda i: (i, 0)),         # degrees
                pl.BlockSpec((tile, F), lambda i: (i, 0)),         # node feats
                pl.BlockSpec((tile, K * F), lambda i: (i, 0)),     # neighbors (lane-dense)
                pl.BlockSpec((n_emb_pad, F), lambda i: (0, 0)),    # emb table
                pl.BlockSpec((F, K * H), lambda i: (0, 0)),        # node-score weights
                pl.BlockSpec((K * F, K * H), lambda i: (0, 0)),    # neighbor-score weights
                pl.BlockSpec((1, K * H), lambda i: (0, 0)),        # bias
                pl.BlockSpec((K * H, F), lambda i: (0, 0)),        # sum-over-K -> feature layout
                pl.BlockSpec((K * H, K * F), lambda i: (0, 0)),    # head -> head_dim expansion
                pl.BlockSpec((K * F, F), lambda i: (0, 0)),        # reduce over K
            ],
            out_specs=pl.BlockSpec((tile, F), lambda i: (i, 0)),
        ),
        compiler_params=pltpu.CompilerParams(
            dimension_semantics=("parallel",),
            vmem_limit_bytes=vmem_limit),
    )(deg, node, neigh, emb_pad, wn_big, wb_big, bias_kh, sum_expand,
      expand_kf, reduce_k)

    return out.reshape(B, N, F)


def reference_jax(node_features, neighbor_features, degrees,
                  emb_table, attn_w, attn_b, *, num_heads):
    """Pure-JAX re-statement of the PyTorch forward pass."""
    struct = emb_table[degrees]                                      # (B, N, F)
    enh = node_features + struct
    B, N, F = enh.shape
    D = F // num_heads
    outs = []
    for h in range(num_heads):
        node_h = enh[..., h * D:(h + 1) * D]                         # (B,N,D)
        neigh_h = neighbor_features[..., h * D:(h + 1) * D]          # (B,N,K,D)
        combined = jnp.concatenate(
            [jnp.broadcast_to(node_h[:, :, None, :], neigh_h.shape), neigh_h],
            axis=-1)                                                 # (B,N,K,2D)
        scores = jnp.einsum('bnkc,c->bnk', combined, attn_w[h]) + attn_b[h]
        w = jax.nn.softmax(scores, axis=-1)
        outs.append(jnp.sum(neigh_h * w[..., None], axis=2))
    return jnp.concatenate(outs, axis=-1)


def _run_case(key, B, N, K, F, H, max_degree=10):
    D = F // H
    k_node, k_neigh, k_deg, k_emb, k_w, k_b = jax.random.split(key, 6)
    node_features = jax.random.normal(k_node, (B, N, F), dtype=jnp.float32)
    neighbor_features = jax.random.normal(k_neigh, (B, N, K, F),
                                          dtype=jnp.float32)
    degrees = jax.random.randint(k_deg, (B, N), 0, max_degree + 1,
                                 dtype=jnp.int32)
    emb_table = 0.1 * jax.random.normal(k_emb, (max_degree + 1, F),
                                        dtype=jnp.float32)
    attn_w = 0.1 * jax.random.normal(k_w, (H, 2 * D), dtype=jnp.float32)
    attn_b = 0.1 * jax.random.normal(k_b, (H,), dtype=jnp.float32)

    out = structural_graph_transformer(
        node_features, neighbor_features, degrees,
        emb_table, attn_w, attn_b, num_heads=H)
    out = jax.block_until_ready(out)

    ref = reference_jax(node_features, neighbor_features, degrees,
                        emb_table, attn_w, attn_b, num_heads=H)
    ref = jax.block_until_ready(ref)

    assert out.shape == (B, N, F)
    # Residual difference comes from default-precision MXU passes on f32
    # operands (the reciprocal is exact now); 5e-3 comfortably covers it.
    assert jnp.allclose(out, ref, atol=5e-3, rtol=5e-3), \
        f"max abs diff {jnp.max(jnp.abs(out - ref))}"


if __name__ == "__main__":
    key = jax.random.PRNGKey(0)
    k1, k2 = jax.random.split(key)

    # Small shapes consistent with the module: B=2, N=16 nodes, K=8 neighbors,
    # feature_dim=32, num_heads=4 (head_dim=8).  M=32 -> 2 tiles of 16 rows.
    _run_case(k1, B=2, N=16, K=8, F=32, H=4)

    # Larger case exercising the balanced-tile grid (M=400 -> 2 tiles of 200).
    _run_case(k2, B=2, N=200, K=8, F=32, H=4)

    print("KERNEL_OK")
</pallas_src>

<mosaic_0001>
module attributes {stable_mosaic.version = 11 : i64} {
  func.func @_graph_attn_kernel(%arg0: i32, %arg1: memref<16x1xi32, #tpu.memory_space<vmem>>, %arg2: memref<16x32xf32, #tpu.memory_space<vmem>>, %arg3: memref<16x256xf32, #tpu.memory_space<vmem>>, %arg4: memref<16x32xf32, #tpu.memory_space<vmem>>, %arg5: memref<32x32xf32, #tpu.memory_space<vmem>>, %arg6: memref<256x32xf32, #tpu.memory_space<vmem>>, %arg7: memref<1x32xf32, #tpu.memory_space<vmem>>, %arg8: memref<32x32xf32, #tpu.memory_space<vmem>>, %arg9: memref<32x256xf32, #tpu.memory_space<vmem>>, %arg10: memref<256x32xf32, #tpu.memory_space<vmem>>, %arg11: memref<16x32xf32, #tpu.memory_space<vmem>>) attributes {dimension_semantics = [#tpu.dimension_semantics<parallel>], iteration_bounds = array<i64: 2>, scalar_prefetch = 0 : i64, scratch_operands = 0 : i64, tpu.core_type = #tpu.core_type<tc>, window_params = [{transform_indices = @transform_0, window_bounds = array<i64: 16, 1>}, {transform_indices = @transform_1, window_bounds = array<i64: 16, 32>}, {transform_indices = @transform_2, window_bounds = array<i64: 16, 256>}, {pipeline_mode = #tpu.pipeline_mode<synchronous>, transform_indices = @transform_3, window_bounds = array<i64: 16, 32>}, {pipeline_mode = #tpu.pipeline_mode<synchronous>, transform_indices = @transform_4, window_bounds = array<i64: 32, 32>}, {pipeline_mode = #tpu.pipeline_mode<synchronous>, transform_indices = @transform_5, window_bounds = array<i64: 256, 32>}, {pipeline_mode = #tpu.pipeline_mode<synchronous>, transform_indices = @transform_6, window_bounds = array<i64: 1, 32>}, {pipeline_mode = #tpu.pipeline_mode<synchronous>, transform_indices = @transform_7, window_bounds = array<i64: 32, 32>}, {pipeline_mode = #tpu.pipeline_mode<synchronous>, transform_indices = @transform_8, window_bounds = array<i64: 32, 256>}, {pipeline_mode = #tpu.pipeline_mode<synchronous>, transform_indices = @transform_9, window_bounds = array<i64: 256, 32>}, {transform_indices = @transform_10, window_bounds = array<i64: 16, 32>}]} {
    %c0 = arith.constant 0 : index
    %c0_0 = arith.constant 0 : index
    %0 = vector.load %arg1[%c0, %c0_0] : memref<16x1xi32, #tpu.memory_space<vmem>>, vector<16x1xi32>
    %1 = tpu.iota {dimensions = array<i32: 1>} : vector<16x16xi32>
    %2 = vector.broadcast %0 : vector<16x1xi32> to vector<16x16xi32>
    %3 = arith.cmpi eq, %1, %2 : vector<16x16xi32>
    %4 = arith.extui %3 : vector<16x16xi1> to vector<16x16xi32>
    %5 = arith.sitofp %4 : vector<16x16xi32> to vector<16x16xf32>
    %c0_1 = arith.constant 0 : index
    %c0_2 = arith.constant 0 : index
    %6 = vector.load %arg4[%c0_1, %c0_2] : memref<16x32xf32, #tpu.memory_space<vmem>>, vector<16x32xf32>
    %cst = arith.constant dense<0.000000e+00> : vector<16x32xf32>
    %7 = tpu.matmul %5, %6, %cst {dimension_numbers = #tpu.dot_dimension_numbers<[1], [0], [0], [1], [0, 0, 1, 1], [], []>} : vector<16x16xf32>, vector<16x32xf32>, vector<16x32xf32> -> vector<16x32xf32>
    %c0_3 = arith.constant 0 : index
    %c0_4 = arith.constant 0 : index
    %8 = vector.load %arg2[%c0_3, %c0_4] : memref<16x32xf32, #tpu.memory_space<vmem>>, vector<16x32xf32>
    %9 = arith.addf %8, %7 : vector<16x32xf32>
    %c0_5 = arith.constant 0 : index
    %c0_6 = arith.constant 0 : index
    %10 = vector.load %arg3[%c0_5, %c0_6] : memref<16x256xf32, #tpu.memory_space<vmem>>, vector<16x256xf32>
    %c0_7 = arith.constant 0 : index
    %c0_8 = arith.constant 0 : index
    %11 = vector.load %arg6[%c0_7, %c0_8] : memref<256x32xf32, #tpu.memory_space<vmem>>, vector<256x32xf32>
    %cst_9 = arith.constant dense<0.000000e+00> : vector<16x32xf32>
    %12 = tpu.matmul %10, %11, %cst_9 {dimension_numbers = #tpu.dot_dimension_numbers<[1], [0], [0], [1], [0, 0, 1, 1], [], []>} : vector<16x256xf32>, vector<256x32xf32>, vector<16x32xf32> -> vector<16x32xf32>
    %c0_10 = arith.constant 0 : index
    %c0_11 = arith.constant 0 : index
    %13 = vector.load %arg5[%c0_10, %c0_11] : memref<32x32xf32, #tpu.memory_space<vmem>>, vector<32x32xf32>
    %cst_12 = arith.constant dense<0.000000e+00> : vector<16x32xf32>
    %14 = tpu.matmul %9, %13, %cst_12 {dimension_numbers = #tpu.dot_dimension_numbers<[1], [0], [0], [1], [0, 0, 1, 1], [], []>} : vector<16x32xf32>, vector<32x32xf32>, vector<16x32xf32> -> vector<16x32xf32>
    %15 = arith.addf %12, %14 : vector<16x32xf32>
    %c0_13 = arith.constant 0 : index
    %c0_14 = arith.constant 0 : index
    %16 = vector.load %arg7[%c0_13, %c0_14] : memref<1x32xf32, #tpu.memory_space<vmem>>, vector<1x32xf32>
    %17 = vector.broadcast %16 : vector<1x32xf32> to vector<16x32xf32>
    %18 = arith.addf %15, %17 : vector<16x32xf32>
    %cst_15 = arith.constant dense<0xFF800000> : vector<16xf32>
    %19 = vector.multi_reduction <maximumf>, %18, %cst_15 [1] : vector<16x32xf32> to vector<16xf32>
    %20 = vector.shape_cast %19 : vector<16xf32> to vector<16x1xf32>
    %21 = vector.broadcast %20 : vector<16x1xf32> to vector<16x32xf32>
    %22 = arith.subf %18, %21 : vector<16x32xf32>
    %23 = math.exp %22 : vector<16x32xf32>
    %c0_16 = arith.constant 0 : index
    %c0_17 = arith.constant 0 : index
    %24 = vector.load %arg8[%c0_16, %c0_17] : memref<32x32xf32, #tpu.memory_space<vmem>>, vector<32x32xf32>
    %cst_18 = arith.constant dense<0.000000e+00> : vector<16x32xf32>
    %25 = tpu.matmul %23, %24, %cst_18 {dimension_numbers = #tpu.dot_dimension_numbers<[1], [0], [0], [1], [0, 0, 1, 1], [], []>} : vector<16x32xf32>, vector<32x32xf32>, vector<16x32xf32> -> vector<16x32xf32>
    %c0_19 = arith.constant 0 : index
    %c0_20 = arith.constant 0 : index
    %26 = vector.load %arg9[%c0_19, %c0_20] : memref<32x256xf32, #tpu.memory_space<vmem>>, vector<32x256xf32>
    %cst_21 = arith.constant dense<0.000000e+00> : vector<16x256xf32>
    %27 = tpu.matmul %23, %26, %cst_21 {dimension_numbers = #tpu.dot_dimension_numbers<[1], [0], [0], [1], [0, 0, 1, 1], [], []>} : vector<16x32xf32>, vector<32x256xf32>, vector<16x256xf32> -> vector<16x256xf32>
    %28 = arith.mulf %27, %10 : vector<16x256xf32>
    %c0_22 = arith.constant 0 : index
    %c0_23 = arith.constant 0 : index
    %29 = vector.load %arg10[%c0_22, %c0_23] : memref<256x32xf32, #tpu.memory_space<vmem>>, vector<256x32xf32>
    %cst_24 = arith.constant dense<0.000000e+00> : vector<16x32xf32>
    %30 = tpu.matmul %28, %29, %cst_24 {dimension_numbers = #tpu.dot_dimension_numbers<[1], [0], [0], [1], [0, 0, 1, 1], [], []>} : vector<16x256xf32>, vector<256x32xf32>, vector<16x32xf32> -> vector<16x32xf32>
    %31 = tpu.reciprocal %25 : vector<16x32xf32> -> vector<16x32xf32>
    %32 = arith.mulf %30, %31 : vector<16x32xf32>
    %c0_25 = arith.constant 0 : index
    %c0_26 = arith.constant 0 : index
    %33 = vector.load %arg11[%c0_25, %c0_26] : memref<16x32xf32, #tpu.memory_space<vmem>>, vector<16x32xf32>
    tpu.vector_store %arg11[%c0_25, %c0_26], %32 {strides = array<i32>} : memref<16x32xf32, #tpu.memory_space<vmem>>, vector<16x32xf32>,
    return
  }
  func.func @transform_0(%arg0: i32) -> (i32, i32) {
    %c0_i32 = arith.constant 0 : i32
    %c0_i32_0 = arith.constant 0 : i32
    return %arg0, %c0_i32 : i32, i32
  }
  func.func @transform_1(%arg0: i32) -> (i32, i32) {
    %c0_i32 = arith.constant 0 : i32
    %c0_i32_0 = arith.constant 0 : i32
    return %arg0, %c0_i32 : i32, i32
  }
  func.func @transform_2(%arg0: i32) -> (i32, i32) {
    %c0_i32 = arith.constant 0 : i32
    %c0_i32_0 = arith.constant 0 : i32
    return %arg0, %c0_i32 : i32, i32
  }
  func.func @transform_3(%arg0: i32) -> (i32, i32) {
    %c0_i32 = arith.constant 0 : i32
    %c0_i32_0 = arith.constant 0 : i32
    %c0_i32_1 = arith.constant 0 : i32
    return %c0_i32, %c0_i32_0 : i32, i32
  }
  func.func @transform_4(%arg0: i32) -> (i32, i32) {
    %c0_i32 = arith.constant 0 : i32
    %c0_i32_0 = arith.constant 0 : i32
    %c0_i32_1 = arith.constant 0 : i32
    return %c0_i32, %c0_i32_0 : i32, i32
  }
  func.func @transform_5(%arg0: i32) -> (i32, i32) {
    %c0_i32 = arith.constant 0 : i32
    %c0_i32_0 = arith.constant 0 : i32
    %c0_i32_1 = arith.constant 0 : i32
    return %c0_i32, %c0_i32_0 : i32, i32
  }
  func.func @transform_6(%arg0: i32) -> (i32, i32) {
    %c0_i32 = arith.constant 0 : i32
    %c0_i32_0 = arith.constant 0 : i32
    %c0_i32_1 = arith.constant 0 : i32
    return %c0_i32, %c0_i32_0 : i32, i32
  }
  func.func @transform_7(%arg0: i32) -> (i32, i32) {
    %c0_i32 = arith.constant 0 : i32
    %c0_i32_0 = arith.constant 0 : i32
    %c0_i32_1 = arith.constant 0 : i32
    return %c0_i32, %c0_i32_0 : i32, i32
  }
  func.func @transform_8(%arg0: i32) -> (i32, i32) {
    %c0_i32 = arith.constant 0 : i32
    %c0_i32_0 = arith.constant 0 : i32
    %c0_i32_1 = arith.constant 0 : i32
    return %c0_i32, %c0_i32_0 : i32, i32
  }
  func.func @transform_9(%arg0: i32) -> (i32, i32) {
    %c0_i32 = arith.constant 0 : i32
    %c0_i32_0 = arith.constant 0 : i32
    %c0_i32_1 = arith.constant 0 : i32
    return %c0_i32, %c0_i32_0 : i32, i32
  }
  func.func @transform_10(%arg0: i32) -> (i32, i32) {
    %c0_i32 = arith.constant 0 : i32
    %c0_i32_0 = arith.constant 0 : i32
    return %arg0, %c0_i32 : i32, i32
  }
}

</mosaic_0001>

<llo_original>
// kernel: tpu_custom_call.1
$region0: #{tpu_custom_call.1}
  #allocation0 [shape = 'u32[]', space=smem, size = 0x4, offset = 0x4, fixed_abs, tag = 'smem constant byte address 0x4 - core index']
  #allocation1 [shape = 'u32[72,128]{1,0:T(1,128)}', space=vmem, size = 0x9000, scoped, tag = 'internal scratch']
  %s0 = inlined_call_operand.vmem [shape: s32[32,1], index: 0, kind: input, shape index: {}]
  %s1 = inlined_call_operand.vmem [shape: f32[32,32], index: 1, kind: input, shape index: {}]
  %s2 = inlined_call_operand.vmem [shape: f32[32,256], index: 2, kind: input, shape index: {}]
  %s3 = inlined_call_operand.vmem [shape: f32[16,32], index: 3, kind: input, shape index: {}]
  %s4 = inlined_call_operand.vmem [shape: f32[32,32], index: 4, kind: input, shape index: {}]
  %s5 = inlined_call_operand.vmem [shape: f32[256,32], index: 5, kind: input, shape index: {}]
  %s6 = inlined_call_operand.vmem [shape: f32[1,32], index: 6, kind: input, shape index: {}]
  %s7 = inlined_call_operand.vmem [shape: f32[32,32], index: 7, kind: input, shape index: {}]
  %s8 = inlined_call_operand.vmem [shape: f32[32,256], index: 8, kind: input, shape index: {}]
  %s9 = inlined_call_operand.vmem [shape: f32[256,32], index: 9, kind: input, shape index: {}]
  %s10 = inlined_call_operand.hbm [shape: f32[32,32], index: 10, kind: output, shape index: {}]
  %s11 = sld [smem:[#allocation0]]
  $region73: #{tpu_custom_call.1} parent=0
    _
  %s13 = ssub.s32 1, %s11
  %s14 = scalar_select 0, %s13, %s11
  $region1: #{tpu_custom_call.1} parent=0
    #allocation2 [shape = 'u8[16384]{0}', space=vmem, size = 0x4000, scoped, tag = 'output window, operand 0']
    #allocation3 [shape = 's32[2]{0}', space=sflag, size = 0x8, scoped, tag = 'scoped memory for tpu_custom_call.1']
    %15 = vsyncpa [#allocation3], 0
    %s16 = scalar_lea.sflag [#allocation3], 1
    %17 = vsyncpa %s16, 0
    loop: start=0, step=1, limit=4
    $region2: #{tpu_custom_call.1} parent=1 // loop_pre_header
      _
    $region3: #{tpu_custom_call.1} parent=1 // loop_header
      %s19 = sphi 0, %s23
      %p20 = scmp.ge.s32.totalorder %s19, 4
      %s29 = sphi 0, %s31
      %s32 = sphi 0, %s29
      %s33 = sphi 0, %s32
      %s49 = sphi 0, %s33
      %s55 = sphi 0, %s57
      %s58 = sphi 0, %s55
      %s59 = sphi 0, %s58
      %s75 = sphi 0, %s59
      %s81 = sphi 0, %s83
      %s84 = sphi 0, %s81
      %s85 = sphi 0, %s84
      %s101 = sphi 0, %s85
      %s105 = sphi 0, %s105
      %s107 = sphi 0, %s105
      %s108 = sphi 0, %s107
      %s122 = sphi 0, %s108
      %s126 = sphi 0, %s126
      %s128 = sphi 0, %s126
      %s129 = sphi 0, %s128
      %s143 = sphi 0, %s129
      %s147 = sphi 0, %s147
      %s149 = sphi 0, %s147
      %s150 = sphi 0, %s149
      %s164 = sphi 0, %s150
      %s168 = sphi 0, %s168
      %s170 = sphi 0, %s168
      %s171 = sphi 0, %s170
      %s185 = sphi 0, %s171
      %s189 = sphi 0, %s189
      %s191 = sphi 0, %s189
      %s192 = sphi 0, %s191
      %s206 = sphi 0, %s192
      %s210 = sphi 0, %s210
      %s212 = sphi 0, %s210
      %s213 = sphi 0, %s212
      %s227 = sphi 0, %s213
      %s231 = sphi 0, %s231
      %s233 = sphi 0, %s231
      %s234 = sphi 0, %s233
      %s248 = sphi 0, %s234
      %s254 = sphi 0, %s256
      %s257 = sphi 0, %s254
      %s258 = sphi 0, %s257
      %s274 = sphi 0, %s258
    $region4: #{tpu_custom_call.1} parent=1 // loop_header_branch
      %22 = sbr.rel (%p20) target = $region8
    $region5: #{tpu_custom_call.1} parent=1 // loop_body
      %s24 = ssub.s32 %s19, 1
      %s25 = ssub.s32 %s19, 2
      %s26 = sadd.s32 %s19, 1
      %s27 = ssub.s32 %s19, %s26
      %p28 = scmp.eq.s32.totalorder %s27, 0
      %s30 = sadd.s32 %s29, 1
      %s31 = scalar_select %p28, %s29, %s30
      %p34 = pneg %p28
      %p35 = scmp.eq.s32.totalorder %s19, 1
      %p36 = por %p34, %p35
      %p37 = scmp.ne.s32.totalorder %s29, %s32
      %p38 = scmp.eq.s32.totalorder %s19, 0
      %p39 = por %p37, %p38
      %p40 = scmp.ne.s32.totalorder %s29, %s32
      %p41 = scmp.eq.s32.totalorder %s24, 1
      %p42 = por %p40, %p41
      %p43 = scmp.ne.s32.totalorder %s32, %s33
      %p44 = scmp.eq.s32.totalorder %s24, 0
      %p45 = por %p43, %p44
      %p46 = scmp.ne.s32.totalorder %s32, %s33
      %p47 = scmp.eq.s32.totalorder %s25, 1
      %p48 = por %p46, %p47
      %p50 = scmp.ne.s32.totalorder %s33, %s49
      %p51 = scmp.eq.s32.totalorder %s25, 0
      %p52 = por %p50, %p51
      %s53 = ssub.s32 %s19, %s26
      %p54 = scmp.eq.s32.totalorder %s53, 0
      %s56 = sadd.s32 %s55, 1
      %s57 = scalar_select %p54, %s55, %s56
      %p60 = pneg %p54
      %p61 = scmp.eq.s32.totalorder %s19, 1
      %p62 = por %p60, %p61
      %p63 = scmp.ne.s32.totalorder %s55, %s58
      %p64 = scmp.eq.s32.totalorder %s19, 0
      %p65 = por %p63, %p64
      %p66 = scmp.ne.s32.totalorder %s55, %s58
      %p67 = scmp.eq.s32.totalorder %s24, 1
      %p68 = por %p66, %p67
      %p69 = scmp.ne.s32.totalorder %s58, %s59
      %p70 = scmp.eq.s32.totalorder %s24, 0
      %p71 = por %p69, %p70
      %p72 = scmp.ne.s32.totalorder %s58, %s59
      %p73 = scmp.eq.s32.totalorder %s25, 1
      %p74 = por %p72, %p73
      %p76 = scmp.ne.s32.totalorder %s59, %s75
      %p77 = scmp.eq.s32.totalorder %s25, 0
      %p78 = por %p76, %p77
      %s79 = ssub.s32 %s19, %s26
      %p80 = scmp.eq.s32.totalorder %s79, 0
      %s82 = sadd.s32 %s81, 1
      %s83 = scalar_select %p80, %s81, %s82
      %p86 = pneg %p80
      %p87 = scmp.eq.s32.totalorder %s19, 1
      %p88 = por %p86, %p87
      %p89 = scmp.ne.s32.totalorder %s81, %s84
      %p90 = scmp.eq.s32.totalorder %s19, 0
      %p91 = por %p89, %p90
      %p92 = scmp.ne.s32.totalorder %s81, %s84
      %p93 = scmp.eq.s32.totalorder %s24, 1
      %p94 = por %p92, %p93
      %p95 = scmp.ne.s32.totalorder %s84, %s85
      %p96 = scmp.eq.s32.totalorder %s24, 0
      %p97 = por %p95, %p96
      %p98 = scmp.ne.s32.totalorder %s84, %s85
      %p99 = scmp.eq.s32.totalorder %s25, 1
      %p100 = por %p98, %p99
      %p102 = scmp.ne.s32.totalorder %s85, %s101
      %p103 = scmp.eq.s32.totalorder %s25, 0
      %p104 = por %p102, %p103
      %s106 = sadd.s32 %s105, 1
      %p109 = scmp.eq.s32.totalorder %s19, 1
      %p110 = scmp.ne.s32.totalorder %s105, %s107
      %p111 = scmp.eq.s32.totalorder %s19, 0
      %p112 = por %p110, %p111
      %p113 = scmp.ne.s32.totalorder %s105, %s107
      %p114 = scmp.eq.s32.totalorder %s24, 1
      %p115 = por %p113, %p114
      %p116 = scmp.ne.s32.totalorder %s107, %s108
      %p117 = scmp.eq.s32.totalorder %s24, 0
      %p118 = por %p116, %p117
      %p119 = scmp.ne.s32.totalorder %s107, %s108
      %p120 = scmp.eq.s32.totalorder %s25, 1
      %p121 = por %p119, %p120
      %p123 = scmp.ne.s32.totalorder %s108, %s122
      %p124 = scmp.eq.s32.totalorder %s25, 0
      %p125 = por %p123, %p124
      %s127 = sadd.s32 %s126, 1
      %p130 = scmp.eq.s32.totalorder %s19, 1
      %p131 = scmp.ne.s32.totalorder %s126, %s128
      %p132 = scmp.eq.s32.totalorder %s19, 0
      %p133 = por %p131, %p132
      %p134 = scmp.ne.s32.totalorder %s126, %s128
      %p135 = scmp.eq.s32.totalorder %s24, 1
      %p136 = por %p134, %p135
      %p137 = scmp.ne.s32.totalorder %s128, %s129
      %p138 = scmp.eq.s32.totalorder %s24, 0
      %p139 = por %p137, %p138
      %p140 = scmp.ne.s32.totalorder %s128, %s129
      %p141 = scmp.eq.s32.totalorder %s25, 1
      %p142 = por %p140, %p141
      %p144 = scmp.ne.s32.totalorder %s129, %s143
      %p145 = scmp.eq.s32.totalorder %s25, 0
      %p146 = por %p144, %p145
      %s148 = sadd.s32 %s147, 1
      %p151 = scmp.eq.s32.totalorder %s19, 1
      %p152 = scmp.ne.s32.totalorder %s147, %s149
      %p153 = scmp.eq.s32.totalorder %s19, 0
      %p154 = por %p152, %p153
      %p155 = scmp.ne.s32.totalorder %s147, %s149
      %p156 = scmp.eq.s32.totalorder %s24, 1
      %p157 = por %p155, %p156
      %p158 = scmp.ne.s32.totalorder %s149, %s150
      %p159 = scmp.eq.s32.totalorder %s24, 0
      %p160 = por %p158, %p159
      %p161 = scmp.ne.s32.totalorder %s149, %s150
      %p162 = scmp.eq.s32.totalorder %s25, 1
      %p163 = por %p161, %p162
      %p165 = scmp.ne.s32.totalorder %s150, %s164
      %p166 = scmp.eq.s32.totalorder %s25, 0
      %p167 = por %p165, %p166
      %s169 = sadd.s32 %s168, 1
      %p172 = scmp.eq.s32.totalorder %s19, 1
      %p173 = scmp.ne.s32.totalorder %s168, %s170
      %p174 = scmp.eq.s32.totalorder %s19, 0
      %p175 = por %p173, %p174
      %p176 = scmp.ne.s32.totalorder %s168, %s170
      %p177 = scmp.eq.s32.totalorder %s24, 1
      %p178 = por %p176, %p177
      %p179 = scmp.ne.s32.totalorder %s170, %s171
      %p180 = scmp.eq.s32.totalorder %s24, 0
      %p181 = por %p179, %p180
      %p182 = scmp.ne.s32.totalorder %s170, %s171
      %p183 = scmp.eq.s32.totalorder %s25, 1
      %p184 = por %p182, %p183
      %p186 = scmp.ne.s32.totalorder %s171, %s185
      %p187 = scmp.eq.s32.totalorder %s25, 0
      %p188 = por %p186, %p187
      %s190 = sadd.s32 %s189, 1
      %p193 = scmp.eq.s32.totalorder %s19, 1
      %p194 = scmp.ne.s32.totalorder %s189, %s191
      %p195 = scmp.eq.s32.totalorder %s19, 0
      %p196 = por %p194, %p195
      %p197 = scmp.ne.s32.totalorder %s189, %s191
      %p198 = scmp.eq.s32.totalorder %s24, 1
      %p199 = por %p197, %p198
      %p200 = scmp.ne.s32.totalorder %s191, %s192
      %p201 = scmp.eq.s32.totalorder %s24, 0
      %p202 = por %p200, %p201
      %p203 = scmp.ne.s32.totalorder %s191, %s192
      %p204 = scmp.eq.s32.totalorder %s25, 1
      %p205 = por %p203, %p204
      %p207 = scmp.ne.s32.totalorder %s192, %s206
      %p208 = scmp.eq.s32.totalorder %s25, 0
      %p209 = por %p207, %p208
      %s211 = sadd.s32 %s210, 1
      %p214 = scmp.eq.s32.totalorder %s19, 1
      %p215 = scmp.ne.s32.totalorder %s210, %s212
      %p216 = scmp.eq.s32.totalorder %s19, 0
      %p217 = por %p215, %p216
      %p218 = scmp.ne.s32.totalorder %s210, %s212
      %p219 = scmp.eq.s32.totalorder %s24, 1
      %p220 = por %p218, %p219
      %p221 = scmp.ne.s32.totalorder %s212, %s213
      %p222 = scmp.eq.s32.totalorder %s24, 0
      %p223 = por %p221, %p222
      %p224 = scmp.ne.s32.totalorder %s212, %s213
      %p225 = scmp.eq.s32.totalorder %s25, 1
      %p226 = por %p224, %p225
      %p228 = scmp.ne.s32.totalorder %s213, %s227
      %p229 = scmp.eq.s32.totalorder %s25, 0
      %p230 = por %p228, %p229
      %s232 = sadd.s32 %s231, 1
      %p235 = scmp.eq.s32.totalorder %s19, 1
      %p236 = scmp.ne.s32.totalorder %s231, %s233
      %p237 = scmp.eq.s32.totalorder %s19, 0
      %p238 = por %p236, %p237
      %p239 = scmp.ne.s32.totalorder %s231, %s233
      %p240 = scmp.eq.s32.totalorder %s24, 1
      %p241 = por %p239, %p240
      %p242 = scmp.ne.s32.totalorder %s233, %s234
      %p243 = scmp.eq.s32.totalorder %s24, 0
      %p244 = por %p242, %p243
      %p245 = scmp.ne.s32.totalorder %s233, %s234
      %p246 = scmp.eq.s32.totalorder %s25, 1
      %p247 = por %p245, %p246
      %p249 = scmp.ne.s32.totalorder %s234, %s248
      %p250 = scmp.eq.s32.totalorder %s25, 0
      %p251 = por %p249, %p250
      %s252 = ssub.s32 %s19, %s26
      %p253 = scmp.eq.s32.totalorder %s252, 0
      %s255 = sadd.s32 %s254, 1
      %s256 = scalar_select %p253, %s254, %s255
      %p259 = pneg %p253
      %p260 = scmp.eq.s32.totalorder %s19, 1
      %p261 = por %p259, %p260
      %p262 = scmp.ne.s32.totalorder %s254, %s257
      %p263 = scmp.eq.s32.totalorder %s19, 0
      %p264 = por %p262, %p263
      %p265 = scmp.ne.s32.totalorder %s254, %s257
      %p266 = scmp.eq.s32.totalorder %s24, 1
      %p267 = por %p265, %p266
      %p268 = scmp.ne.s32.totalorder %s257, %s258
      %p269 = scmp.eq.s32.totalorder %s24, 0
      %p270 = por %p268, %p269
      %p271 = scmp.ne.s32.totalorder %s257, %s258
      %p272 = scmp.eq.s32.totalorder %s25, 1
      %p273 = por %p271, %p272
      %p275 = scmp.ne.s32.totalorder %s258, %s274
      %p276 = scmp.eq.s32.totalorder %s25, 0
      %p277 = por %p275, %p276
      %p278 = scmp.le.s32.totalorder 1, %s19
      %p279 = scmp.lt.s32.totalorder %s19, 3
      %p280 = pnand %p278, %p279
      %p281 = pneg %p280
      // Predicated region
      $region9: #{tpu_custom_call.1} parent=5 // pred_check
        _
      $region10: #{tpu_custom_call.1} parent=5 // pred_check_branch
        %283 = sbr.rel (%p280) target = $region12
      $region11: #{tpu_custom_call.1} parent=5 // pred_region
        %s284 = ssub.s32 %s19, 1
        // Predicated region
        $region13: #{tpu_custom_call.1} parent=11 // pred_check
          %p285 = pneg %p118
        $region14: #{tpu_custom_call.1} parent=11 // pred_check_branch
          %287 = sbr.rel (%p285) target = $region16
        $region15: #{tpu_custom_call.1} parent=11 // pred_region
          _
        $region16: #{tpu_custom_call.1} parent=11 // pred_fallthru
          _
        // Predicated region
        $region17: #{tpu_custom_call.1} parent=11 // pred_check
          %p288 = pneg %p139
        $region18: #{tpu_custom_call.1} parent=11 // pred_check_branch
          %290 = sbr.rel (%p288) target = $region20
        $region19: #{tpu_custom_call.1} parent=11 // pred_region
          _
        $region20: #{tpu_custom_call.1} parent=11 // pred_fallthru
          _
        // Predicated region
        $region21: #{tpu_custom_call.1} parent=11 // pred_check
          %p291 = pneg %p160
        $region22: #{tpu_custom_call.1} parent=11 // pred_check_branch
          %293 = sbr.rel (%p291) target = $region24
        $region23: #{tpu_custom_call.1} parent=11 // pred_region
          _
        $region24: #{tpu_custom_call.1} parent=11 // pred_fallthru
          _
        // Predicated region
        $region25: #{tpu_custom_call.1} parent=11 // pred_check
          %p294 = pneg %p181
        $region26: #{tpu_custom_call.1} parent=11 // pred_check_branch
          %296 = sbr.rel (%p294) target = $region28
        $region27: #{tpu_custom_call.1} parent=11 // pred_region
          _
        $region28: #{tpu_custom_call.1} parent=11 // pred_fallthru
          _
        // Predicated region
        $region29: #{tpu_custom_call.1} parent=11 // pred_check
          %p297 = pneg %p202
        $region30: #{tpu_custom_call.1} parent=11 // pred_check_branch
          %299 = sbr.rel (%p297) target = $region32
        $region31: #{tpu_custom_call.1} parent=11 // pred_region
          _
        $region32: #{tpu_custom_call.1} parent=11 // pred_fallthru
          _
        // Predicated region
        $region33: #{tpu_custom_call.1} parent=11 // pred_check
          %p300 = pneg %p223
        $region34: #{tpu_custom_call.1} parent=11 // pred_check_branch
          %302 = sbr.rel (%p300) target = $region36
        $region35: #{tpu_custom_call.1} parent=11 // pred_region
          _
        $region36: #{tpu_custom_call.1} parent=11 // pred_fallthru
          _
        // Predicated region
        $region37: #{tpu_custom_call.1} parent=11 // pred_check
          %p303 = pneg %p244
        $region38: #{tpu_custom_call.1} parent=11 // pred_check_branch
          %305 = sbr.rel (%p303) target = $region40
        $region39: #{tpu_custom_call.1} parent=11 // pred_region
          _
        $region40: #{tpu_custom_call.1} parent=11 // pred_fallthru
          _
      $region12: #{tpu_custom_call.1} parent=5 // pred_fallthru
        _
      %p306 = scmp.lt.s32.totalorder %s19, 2
      // Predicated region
      $region41: #{tpu_custom_call.1} parent=5 // pred_check
        %p307 = pneg %p306
      $region42: #{tpu_custom_call.1} parent=5 // pred_check_branch
        %309 = sbr.rel (%p307) target = $region44
      $region43: #{tpu_custom_call.1} parent=5 // pred_region
        // Predicated region
        $region45: #{tpu_custom_call.1} parent=43 // pred_check
          %p310 = pneg %p39
        $region46: #{tpu_custom_call.1} parent=43 // pred_check_branch
          %312 = sbr.rel (%p310) target = $region48
        $region47: #{tpu_custom_call.1} parent=43 // pred_region
          %s313 = smul.u32 2, %s19
          %p314 = scmp.lt.s32.totalorder %s313, 3
          %s315 = scalar_select %p314, %s313, 3
          %s316 = smul.addr %s315, 8
          %s317 = scalar_lea.vmem %s0, %s316
          %s318 = smul.u32 2, %s19
        $region48: #{tpu_custom_call.1} parent=43 // pred_fallthru
          _
        // Predicated region
        $region49: #{tpu_custom_call.1} parent=43 // pred_check
          %p319 = pneg %p65
        $region50: #{tpu_custom_call.1} parent=43 // pred_check_branch
          %321 = sbr.rel (%p319) target = $region52
        $region51: #{tpu_custom_call.1} parent=43 // pred_region
          %s322 = smul.u32 2, %s19
          %p323 = scmp.lt.s32.totalorder %s322, 3
          %s324 = scalar_select %p323, %s322, 3
          %s325 = smul.addr %s324, 8
          %s326 = scalar_lea.vmem %s1, %s325
          %s327 = smul.u32 2, %s19
        $region52: #{tpu_custom_call.1} parent=43 // pred_fallthru
          _
        // Predicated region
        $region53: #{tpu_custom_call.1} parent=43 // pred_check
          %p328 = pneg %p91
        $region54: #{tpu_custom_call.1} parent=43 // pred_check_branch
          %330 = sbr.rel (%p328) target = $region56
        $region55: #{tpu_custom_call.1} parent=43 // pred_region
          %s331 = smul.u32 2, %s19
          %p332 = scmp.lt.s32.totalorder %s331, 3
          %s333 = scalar_select %p332, %s331, 3
          %s334 = smul.addr %s333, 2
          %s335 = smul.addr %s334, 8
          %s336 = scalar_lea.vmem %s2, %s335
          %s337 = smul.u32 2, %s19
        $region56: #{tpu_custom_call.1} parent=43 // pred_fallthru
          _
      $region44: #{tpu_custom_call.1} parent=5 // pred_fallthru
        _
      %p338 = scmp.le.s32.totalorder 1, %s19
      %p339 = scmp.lt.s32.totalorder %s19, 3
      %p340 = pnand %p338, %p339
      %p341 = pneg %p340
      // Predicated region
      $region57: #{tpu_custom_call.1} parent=5 // pred_check
        _
      $region58: #{tpu_custom_call.1} parent=5 // pred_check_branch
        %343 = sbr.rel (%p340) target = $region60
      $region59: #{tpu_custom_call.1} parent=5 // pred_region
        %s344 = ssub.s32 %s19, 1
        %s345 = smul.u32 2, %s24
        %p346 = scmp.lt.s32.totalorder %s345, 3
        %s347 = scalar_select %p346, %s345, 3
        %s348 = smul.addr %s347, 8
        %s349 = scalar_lea.vmem %s0, %s348
        %p350 = pneg %p45
        %p351 = pneg %p42
        %s352 = smul.u32 2, %s24
        %p353 = scmp.lt.s32.totalorder %s352, 3
        %s354 = scalar_select %p353, %s352, 3
        %s355 = smul.addr %s354, 8
        %s356 = scalar_lea.vmem %s1, %s355
        %p357 = pneg %p71
        %p358 = pneg %p68
        %s359 = smul.u32 2, %s24
        %p360 = scmp.lt.s32.totalorder %s359, 3
        %s361 = scalar_select %p360, %s359, 3
        %s362 = smul.addr %s361, 2
        %s363 = smul.addr %s362, 8
        %s364 = scalar_lea.vmem %s2, %s363
        %p365 = pneg %p97
        %p366 = pneg %p94
        %p367 = pneg %p118
        %p368 = pneg %p115
        %p369 = pneg %p139
        %p370 = pneg %p136
        %p371 = pneg %p160
        %p372 = pneg %p157
        %p373 = pneg %p181
        %p374 = pneg %p178
        %p375 = pneg %p202
        %p376 = pneg %p199
        %p377 = pneg %p223
        %p378 = pneg %p220
        %p379 = pneg %p244
        %p380 = pneg %p241
        %p381 = pneg %p270
        %p382 = pneg %p267
        %s383 = sand.u32 %s257, 1
        %s384 = scalar_lea.sflag [#allocation3], %s383
        %s385 = sand.u32 %s257, 1
        %s386 = smul.addr %s385, 16
        %s387 = scalar_lea.vmem [#allocation2], %s386
        %s388 = smul.u32 2, %s24
        %p389 = scmp.lt.s32.totalorder %s388, 3
        %s390 = scalar_select %p389, %s388, 3
        %s391 = smul.addr %s390, 8
        %s392 = scalar_lea.vmem %s0, %s391
        %s393 = smul.u32 2, %s24
        %s394 = smul.u32 2, %s24
        %p395 = scmp.lt.s32.totalorder %s394, 3
        %s396 = scalar_select %p395, %s394, 3
        %s397 = smul.addr %s396, 8
        %s398 = scalar_lea.vmem %s1, %s397
        %s399 = smul.u32 2, %s24
        %s400 = smul.u32 2, %s24
        %p401 = scmp.lt.s32.totalorder %s400, 3
        %s402 = scalar_select %p401, %s400, 3
        %s403 = smul.addr %s402, 2
        %s404 = smul.addr %s403, 8
        %s405 = scalar_lea.vmem %s2, %s404
        %s406 = smul.u32 2, %s24
        %s407 = smul.u32 2, %s24
        %v408 = vld [vmem:[%s392] sm:$0xff]
        %v409 = vld [vmem:[%s392 + $0x8] sm:$0xff]
        %v410 = vlaneseq
        %v411 = vand.u32 %v410, 127
        %412 = vset.pattern.permute.xlu0 0
        %413 = vperm.xlu0 %412, %v408
        %v414 = vpop.permute.xlu0 %413
        %415 = vset.pattern.permute.xlu0 0
        %416 = vperm.xlu0 %415, %v409
        %v417 = vpop.permute.xlu0 %416
        %vm418 = vcmp.eq.s32.totalorder %v411, %v414
        %vm419 = vcmp.eq.s32.totalorder %v411, %v417
        %v420 = vsel %vm418, 1, 0
        %v421 = vsel %vm419, 1, 0
        %v422 = vcvt.s32.f32 %v420
        %v423 = vcvt.s32.f32 %v421
        %v424 = vld [vmem:[%s3] sm:$0xff]
        %v425 = vld [vmem:[%s3 + $0x8] sm:$0xff]
        %vm426 = vcmask 130048
        %v428 = vsel %vm426, %v422, 0
        %v431 = vsel %vm426, %v423, 0
        %433 = vmatpush.msra.mxu0 0.0
        %434 = vmatpush.msra.mxu0 0.0
        %435 = vmatpush.msra.mxu0 0.0
        %436 = vmatpush.msra.mxu0 0.0
        %437 = vmatpush.msra.mxu0 0.0
        %438 = vmatpush.msra.mxu0 0.0
        %439 = vmatpush.msra.mxu0 0.0
        %440 = vmatpush.msra.mxu0 0.0
        %441 = vmatpush.msra.mxu0 0.0
        %442 = vmatpush.msra.mxu0 0.0
        %443 = vmatpush.msra.mxu0 0.0
        %444 = vmatpush.msra.mxu0 0.0
        %445 = vmatpush.msra.mxu0 0.0
        %446 = vmatpush.msra.mxu0 0.0
        %447 = vmatpush.msra.mxu0 %v425
        %448 = vmatpush.msra.mxu0 %v424
        %449 = vmatmul.f32.gmra.mxu0 %v428
        %v450 = vpop.f32.mrf.mxu0
        %v451 = vadd.f32 0.0, %v450
        %452 = vmatmul.f32.gmra.mxu0 %v431
        %v453 = vpop.f32.mrf.mxu0
        %v454 = vadd.f32 0.0, %v453
        %455 = vdwg.mxu0
        %v456 = vld [vmem:[%s398] sm:$0xff]
        %v457 = vld [vmem:[%s398 + $0x8] sm:$0xff]
        %v458 = vadd.f32 %v456, %v451
        %v459 = vadd.f32 %v457, %v454
        %v460 = vld [vmem:[%s405] sm:$0xff]
        %v461 = vld [vmem:[%s405 + $0x8] sm:$0xff]
        %v462 = vld [vmem:[%s405 + $0x10] sm:$0xff]
        %v463 = vld [vmem:[%s405 + $0x18] sm:$0xff]
        %v464 = vld [vmem:[%s5] sm:$0xff]
        %v465 = vld [vmem:[%s5 + $0x8] sm:$0xff]
        %v466 = vld [vmem:[%s5 + $0x10] sm:$0xff]
        %v467 = vld [vmem:[%s5 + $0x18] sm:$0xff]
        %v468 = vld [vmem:[%s5 + $0x20] sm:$0xff]
        %v469 = vld [vmem:[%s5 + $0x28] sm:$0xff]
        %v470 = vld [vmem:[%s5 + $0x30] sm:$0xff]
        %v471 = vld [vmem:[%s5 + $0x38] sm:$0xff]
        %v472 = vld [vmem:[%s5 + $0x40] sm:$0xff]
        %v473 = vld [vmem:[%s5 + $0x48] sm:$0xff]
        %v474 = vld [vmem:[%s5 + $0x50] sm:$0xff]
        %v475 = vld [vmem:[%s5 + $0x58] sm:$0xff]
        %v476 = vld [vmem:[%s5 + $0x60] sm:$0xff]
        %v477 = vld [vmem:[%s5 + $0x68] sm:$0xff]
        %v478 = vld [vmem:[%s5 + $0x70] sm:$0xff]
        %v479 = vld [vmem:[%s5 + $0x78] sm:$0xff]
        %v480 = vld [vmem:[%s5 + $0x80] sm:$0xff]
        %v481 = vld [vmem:[%s5 + $0x88] sm:$0xff]
        %v482 = vld [vmem:[%s5 + $0x90] sm:$0xff]
        %v483 = vld [vmem:[%s5 + $0x98] sm:$0xff]
        %v484 = vld [vmem:[%s5 + $0xa0] sm:$0xff]
        %v485 = vld [vmem:[%s5 + $0xa8] sm:$0xff]
        %v486 = vld [vmem:[%s5 + $0xb0] sm:$0xff]
        %v487 = vld [vmem:[%s5 + $0xb8] sm:$0xff]
        %v488 = vld [vmem:[%s5 + $0xc0] sm:$0xff]
        %v489 = vld [vmem:[%s5 + $0xc8] sm:$0xff]
        %v490 = vld [vmem:[%s5 + $0xd0] sm:$0xff]
        %v491 = vld [vmem:[%s5 + $0xd8] sm:$0xff]
        %v492 = vld [vmem:[%s5 + $0xe0] sm:$0xff]
        %v493 = vld [vmem:[%s5 + $0xe8] sm:$0xff]
        %v494 = vld [vmem:[%s5 + $0xf0] sm:$0xff]
        %v495 = vld [vmem:[%s5 + $0xf8] sm:$0xff]
        %v496 = vld [vmem:[%s4] sm:$0xff]
        %v497 = vld [vmem:[%s4 + $0x8] sm:$0xff]
        %v498 = vld [vmem:[%s4 + $0x10] sm:$0xff]
        %v499 = vld [vmem:[%s4 + $0x18] sm:$0xff]
        %vm500 = vcmask 261120
        %v502 = vsel %vm500, %v458, 0
        %v505 = vsel %vm500, %v459, 0
        %507 = vmatpush.msra.mxu0 0.0
        %508 = vmatpush.msra.mxu0 0.0
        %509 = vmatpush.msra.mxu0 0.0
        %510 = vmatpush.msra.mxu0 0.0
        %511 = vmatpush.msra.mxu0 0.0
        %512 = vmatpush.msra.mxu0 0.0
        %513 = vmatpush.msra.mxu0 0.0
        %514 = vmatpush.msra.mxu0 0.0
        %515 = vmatpush.msra.mxu0 0.0
        %516 = vmatpush.msra.mxu0 0.0
        %517 = vmatpush.msra.mxu0 0.0
        %518 = vmatpush.msra.mxu0 0.0
        %519 = vmatpush.msra.mxu0 %v499
        %520 = vmatpush.msra.mxu0 %v498
        %521 = vmatpush.msra.mxu0 %v497
        %522 = vmatpush.msra.mxu0 %v496
        %523 = vmatmul.f32.gmra.mxu0 %v502
        %v524 = vpop.f32.mrf.mxu0
        %v525 = vadd.f32 0.0, %v524
        %526 = vmatmul.f32.gmra.mxu0 %v505
        %v527 = vpop.f32.mrf.mxu0
        %v528 = vadd.f32 0.0, %v527
        %529 = vdwg.mxu0
        %530 = vmatpush.msra.mxu0 %v479
        %531 = vmatpush.msra.mxu0 %v478
        %532 = vmatpush.msra.mxu0 %v477
        %533 = vmatpush.msra.mxu0 %v476
        %534 = vmatpush.msra.mxu0 %v475
        %535 = vmatpush.msra.mxu0 %v474
        %536 = vmatpush.msra.mxu0 %v473
        %537 = vmatpush.msra.mxu0 %v472
        %538 = vmatpush.msra.mxu0 %v471
        %539 = vmatpush.msra.mxu0 %v470
        %540 = vmatpush.msra.mxu0 %v469
        %541 = vmatpush.msra.mxu0 %v468
        %542 = vmatpush.msra.mxu0 %v467
        %543 = vmatpush.msra.mxu0 %v466
        %544 = vmatpush.msra.mxu0 %v465
        %545 = vmatpush.msra.mxu0 %v464
        %546 = vmatmul.f32.gmra.mxu0 %v460
        %v547 = vpop.f32.mrf.mxu0
        %v548 = vadd.f32 %v525, %v547
        %549 = vmatmul.f32.gmra.mxu0 %v462
        %v550 = vpop.f32.mrf.mxu0
        %v551 = vadd.f32 %v528, %v550
        %552 = vdwg.mxu0
        %553 = vmatpush.msra.mxu0 %v495
        %554 = vmatpush.msra.mxu0 %v494
        %555 = vmatpush.msra.mxu0 %v493
        %556 = vmatpush.msra.mxu0 %v492
        %557 = vmatpush.msra.mxu0 %v491
        %558 = vmatpush.msra.mxu0 %v490
        %559 = vmatpush.msra.mxu0 %v489
        %560 = vmatpush.msra.mxu0 %v488
        %561 = vmatpush.msra.mxu0 %v487
        %562 = vmatpush.msra.mxu0 %v486
        %563 = vmatpush.msra.mxu0 %v485
        %564 = vmatpush.msra.mxu0 %v484
        %565 = vmatpush.msra.mxu0 %v483
        %566 = vmatpush.msra.mxu0 %v482
        %567 = vmatpush.msra.mxu0 %v481
        %568 = vmatpush.msra.mxu0 %v480
        %569 = vmatmul.f32.gmra.mxu0 %v461
        %v570 = vpop.f32.mrf.mxu0
        %v571 = vadd.f32 %v548, %v570
        %572 = vmatmul.f32.gmra.mxu0 %v463
        %v573 = vpop.f32.mrf.mxu0
        %v574 = vadd.f32 %v551, %v573
        %575 = vdwg.mxu0
        %v576 = vld [vmem:[%s6] sm:$0x1]
        %v578 = vperm.slane %v576, 0
        %v580 = vadd.f32 %v571, %v578
        %v581 = vadd.f32 %v574, %v578
        %v582 = vsel %vm500, %v580, -inf
        %583 = vmax.xlane.f32.xlu0 %v582
        %v584 = vpop.xlane.xlu0 %583
        %v585 = vsel %vm500, %v581, -inf
        %586 = vmax.xlane.f32.xlu0 %v585
        %v587 = vpop.xlane.xlu0 %586
        %v588 = vsub.f32 %v580, %v584
        %v589 = vsub.f32 %v581, %v587
        %v590 = vmul.f32 %v588, 1.442695
        %v591 = vpow.pop %v590
        %v592 = vmul.f32 %v589, 1.442695
        %v593 = vpow.pop %v592
        %v594 = vld [vmem:[%s7] sm:$0xff]
        %v595 = vld [vmem:[%s7 + $0x8] sm:$0xff]
        %v596 = vld [vmem:[%s7 + $0x10] sm:$0xff]
        %v597 = vld [vmem:[%s7 + $0x18] sm:$0xff]
        %v599 = vsel %vm500, %v591, 0
        %v602 = vsel %vm500, %v593, 0
        %604 = vmatpush.msra.mxu0 0.0
        %605 = vmatpush.msra.mxu0 0.0
        %606 = vmatpush.msra.mxu0 0.0
        %607 = vmatpush.msra.mxu0 0.0
        %608 = vmatpush.msra.mxu0 0.0
        %609 = vmatpush.msra.mxu0 0.0
        %610 = vmatpush.msra.mxu0 0.0
        %611 = vmatpush.msra.mxu0 0.0
        %612 = vmatpush.msra.mxu0 0.0
        %613 = vmatpush.msra.mxu0 0.0
        %614 = vmatpush.msra.mxu0 0.0
        %615 = vmatpush.msra.mxu0 0.0
        %616 = vmatpush.msra.mxu0 %v597
        %617 = vmatpush.msra.mxu0 %v596
        %618 = vmatpush.msra.mxu0 %v595
        %619 = vmatpush.msra.mxu0 %v594
        %620 = vmatmul.f32.gmra.mxu0 %v599
        %v621 = vpop.f32.mrf.mxu0
        %v622 = vadd.f32 0.0, %v621
        %623 = vmatmul.f32.gmra.mxu0 %v602
        %v624 = vpop.f32.mrf.mxu0
        %v625 = vadd.f32 0.0, %v624
        %626 = vdwg.mxu0
        %v627 = vld [vmem:[%s8] sm:$0xff]
        %v628 = vld [vmem:[%s8 + $0x8] sm:$0xff]
        %v629 = vld [vmem:[%s8 + $0x10] sm:$0xff]
        %v630 = vld [vmem:[%s8 + $0x18] sm:$0xff]
        %v631 = vld [vmem:[%s8 + $0x20] sm:$0xff]
        %v632 = vld [vmem:[%s8 + $0x28] sm:$0xff]
        %v633 = vld [vmem:[%s8 + $0x30] sm:$0xff]
        %v634 = vld [vmem:[%s8 + $0x38] sm:$0xff]
        %635 = vmatpush.msra.mxu0 0.0
        %636 = vmatpush.msra.mxu0 0.0
        %637 = vmatpush.msra.mxu0 0.0
        %638 = vmatpush.msra.mxu0 0.0
        %639 = vmatpush.msra.mxu0 0.0
        %640 = vmatpush.msra.mxu0 0.0
        %641 = vmatpush.msra.mxu0 0.0
        %642 = vmatpush.msra.mxu0 0.0
        %643 = vmatpush.msra.mxu0 0.0
        %644 = vmatpush.msra.mxu0 0.0
        %645 = vmatpush.msra.mxu0 0.0
        %646 = vmatpush.msra.mxu0 0.0
        %647 = vmatpush.msra.mxu0 %v633
        %648 = vmatpush.msra.mxu0 %v631
        %649 = vmatpush.msra.mxu0 %v629
        %650 = vmatpush.msra.mxu0 %v627
        %651 = vmatmul.f32.gmra.mxu0 %v599
        %v652 = vpop.f32.mrf.mxu0
        %v653 = vadd.f32 0.0, %v652
        %654 = vmatmul.f32.gmra.mxu0 %v602
        %v655 = vpop.f32.mrf.mxu0
        %v656 = vadd.f32 0.0, %v655
        %657 = vdwg.mxu0
        %658 = vmatpush.msra.mxu0 0.0
        %659 = vmatpush.msra.mxu0 0.0
        %660 = vmatpush.msra.mxu0 0.0
        %661 = vmatpush.msra.mxu0 0.0
        %662 = vmatpush.msra.mxu0 0.0
        %663 = vmatpush.msra.mxu0 0.0
        %664 = vmatpush.msra.mxu0 0.0
        %665 = vmatpush.msra.mxu0 0.0
        %666 = vmatpush.msra.mxu0 0.0
        %667 = vmatpush.msra.mxu0 0.0
        %668 = vmatpush.msra.mxu0 0.0
        %669 = vmatpush.msra.mxu0 0.0
        %670 = vmatpush.msra.mxu0 %v634
        %671 = vmatpush.msra.mxu0 %v632
        %672 = vmatpush.msra.mxu0 %v630
        %673 = vmatpush.msra.mxu0 %v628
        %674 = vmatmul.f32.gmra.mxu0 %v599
        %v675 = vpop.f32.mrf.mxu0
        %v676 = vadd.f32 0.0, %v675
        %677 = vmatmul.f32.gmra.mxu0 %v602
        %v678 = vpop.f32.mrf.mxu0
        %v679 = vadd.f32 0.0, %v678
        %680 = vdwg.mxu0
        %v681 = vmul.f32 %v653, %v460
        %v682 = vmul.f32 %v676, %v461
        %v683 = vmul.f32 %v656, %v462
        %v684 = vmul.f32 %v679, %v463
        %v685 = vld [vmem:[%s9] sm:$0xff]
        %v686 = vld [vmem:[%s9 + $0x8] sm:$0xff]
        %v687 = vld [vmem:[%s9 + $0x10] sm:$0xff]
        %v688 = vld [vmem:[%s9 + $0x18] sm:$0xff]
        %v689 = vld [vmem:[%s9 + $0x20] sm:$0xff]
        %v690 = vld [vmem:[%s9 + $0x28] sm:$0xff]
        %v691 = vld [vmem:[%s9 + $0x30] sm:$0xff]
        %v692 = vld [vmem:[%s9 + $0x38] sm:$0xff]
        %v693 = vld [vmem:[%s9 + $0x40] sm:$0xff]
        %v694 = vld [vmem:[%s9 + $0x48] sm:$0xff]
        %v695 = vld [vmem:[%s9 + $0x50] sm:$0xff]
        %v696 = vld [vmem:[%s9 + $0x58] sm:$0xff]
        %v697 = vld [vmem:[%s9 + $0x60] sm:$0xff]
        %v698 = vld [vmem:[%s9 + $0x68] sm:$0xff]
        %v699 = vld [vmem:[%s9 + $0x70] sm:$0xff]
        %v700 = vld [vmem:[%s9 + $0x78] sm:$0xff]
        %v701 = vld [vmem:[%s9 + $0x80] sm:$0xff]
        %v702 = vld [vmem:[%s9 + $0x88] sm:$0xff]
        %v703 = vld [vmem:[%s9 + $0x90] sm:$0xff]
        %v704 = vld [vmem:[%s9 + $0x98] sm:$0xff]
        %v705 = vld [vmem:[%s9 + $0xa0] sm:$0xff]
        %v706 = vld [vmem:[%s9 + $0xa8] sm:$0xff]
        %v707 = vld [vmem:[%s9 + $0xb0] sm:$0xff]
        %v708 = vld [vmem:[%s9 + $0xb8] sm:$0xff]
        %v709 = vld [vmem:[%s9 + $0xc0] sm:$0xff]
        %v710 = vld [vmem:[%s9 + $0xc8] sm:$0xff]
        %v711 = vld [vmem:[%s9 + $0xd0] sm:$0xff]
        %v712 = vld [vmem:[%s9 + $0xd8] sm:$0xff]
        %v713 = vld [vmem:[%s9 + $0xe0] sm:$0xff]
        %v714 = vld [vmem:[%s9 + $0xe8] sm:$0xff]
        %v715 = vld [vmem:[%s9 + $0xf0] sm:$0xff]
        %v716 = vld [vmem:[%s9 + $0xf8] sm:$0xff]
        %717 = vmatpush.msra.mxu0 %v700
        %718 = vmatpush.msra.mxu0 %v699
        %719 = vmatpush.msra.mxu0 %v698
        %720 = vmatpush.msra.mxu0 %v697
        %721 = vmatpush.msra.mxu0 %v696
        %722 = vmatpush.msra.mxu0 %v695
        %723 = vmatpush.msra.mxu0 %v694
        %724 = vmatpush.msra.mxu0 %v693
        %725 = vmatpush.msra.mxu0 %v692
        %726 = vmatpush.msra.mxu0 %v691
        %727 = vmatpush.msra.mxu0 %v690
        %728 = vmatpush.msra.mxu0 %v689
        %729 = vmatpush.msra.mxu0 %v688
        %730 = vmatpush.msra.mxu0 %v687
        %731 = vmatpush.msra.mxu0 %v686
        %732 = vmatpush.msra.mxu0 %v685
        %733 = vmatmul.f32.gmra.mxu0 %v681
        %v734 = vpop.f32.mrf.mxu0
        %v735 = vadd.f32 0.0, %v734
        %736 = vmatmul.f32.gmra.mxu0 %v683
        %v737 = vpop.f32.mrf.mxu0
        %v738 = vadd.f32 0.0, %v737
        %739 = vdwg.mxu0
        %740 = vmatpush.msra.mxu0 %v716
        %741 = vmatpush.msra.mxu0 %v715
        %742 = vmatpush.msra.mxu0 %v714
        %743 = vmatpush.msra.mxu0 %v713
        %744 = vmatpush.msra.mxu0 %v712
        %745 = vmatpush.msra.mxu0 %v711
        %746 = vmatpush.msra.mxu0 %v710
        %747 = vmatpush.msra.mxu0 %v709
        %748 = vmatpush.msra.mxu0 %v708
        %749 = vmatpush.msra.mxu0 %v707
        %750 = vmatpush.msra.mxu0 %v706
        %751 = vmatpush.msra.mxu0 %v705
        %752 = vmatpush.msra.mxu0 %v704
        %753 = vmatpush.msra.mxu0 %v703
        %754 = vmatpush.msra.mxu0 %v702
        %755 = vmatpush.msra.mxu0 %v701
        %756 = vmatmul.f32.gmra.mxu0 %v682
        %v757 = vpop.f32.mrf.mxu0
        %v758 = vadd.f32 %v735, %v757
        %759 = vmatmul.f32.gmra.mxu0 %v684
        %v760 = vpop.f32.mrf.mxu0
        %v761 = vadd.f32 %v738, %v760
        %762 = vdwg.mxu0
        %v763 = vrcp.pop %v622
        %v764 = vmul.f32 %v622, %v763
        %v765 = vsub.f32 1.0, %v764
        %v766 = vmul.f32 %v763, %v765
        %v767 = vadd.f32 %v763, %v766
        %vm768 = vweird.f32 %v622
        %vm769 = vweird.f32 %v763
        %vm770 = vmor %vm768, %vm769
        %v771 = vsel %vm770, %v763, %v767
        %v772 = vand.u32 2147483647, %v622
        %vm773 = vcmp.eq.f32.partialorder %v772, 8.507059e+37
        %v774 = vand.u32 %v622, 2147483648
        %v775 = vor.u32 1.1754944e-38, %v774
        %v776 = vsel %vm773, %v775, %v771
        %v777 = vrcp.pop %v625
        %v778 = vmul.f32 %v625, %v777
        %v779 = vsub.f32 1.0, %v778
        %v780 = vmul.f32 %v777, %v779
        %v781 = vadd.f32 %v777, %v780
        %vm782 = vweird.f32 %v625
        %vm783 = vweird.f32 %v777
        %vm784 = vmor %vm782, %vm783
        %v785 = vsel %vm784, %v777, %v781
        %v786 = vand.u32 2147483647, %v625
        %vm787 = vcmp.eq.f32.partialorder %v786, 8.507059e+37
        %v788 = vand.u32 %v625, 2147483648
        %v789 = vor.u32 1.1754944e-38, %v788
        %v790 = vsel %vm787, %v789, %v785
        %v791 = vmul.f32 %v758, %v776
        %v792 = vmul.f32 %v761, %v790
        %793 = vst.msk [vmem:[%s387] sm:$0xff] %vm500, %v791
        %794 = vst.msk [vmem:[%s387 + $0x8] sm:$0xff] %vm500, %v792
        %s795 = sand.u32 %s257, 1
        %s796 = scalar_lea.sflag [#allocation3], %s795
        %s797 = sand.u32 %s257, 1
        %s798 = smul.addr %s797, 16
        %s799 = scalar_lea.vmem [#allocation2], %s798
        // Predicated region
        $region61: #{tpu_custom_call.1} parent=59 // pred_check
          %p800 = pneg %p267
        $region62: #{tpu_custom_call.1} parent=59 // pred_check_branch
          %802 = sbr.rel (%p800) target = $region64
        $region63: #{tpu_custom_call.1} parent=59 // pred_region
          %s803 = smul.u32 2, %s24
          %805 = vsyncadd %s796, 0
          %s806 = smul.addr %s803, 8
          %s807 = scalar_lea.hbm %s10, %s806
          %s808 = sshll.u32 %s799, 4
          %s809 = int_to_ptr.vmem [resolvable:$true] %s808
          %s810 = sshll.u32 %s807, 4
          %s811 = int_to_ptr.hbm [resolvable:$true] %s810
          %816 = dma.vmem_to_hbm [thread:$0]  %s809, 256, %s811, %s796, 128, 128, 8
        $region64: #{tpu_custom_call.1} parent=59 // pred_fallthru
          _
      $region60: #{tpu_custom_call.1} parent=5 // pred_fallthru
        _
      %p817 = scmp.le.s32.totalorder 2, %s19
      // Predicated region
      $region65: #{tpu_custom_call.1} parent=5 // pred_check
        %p818 = pneg %p817
      $region66: #{tpu_custom_call.1} parent=5 // pred_check_branch
        %820 = sbr.rel (%p818) target = $region68
      $region67: #{tpu_custom_call.1} parent=5 // pred_region
        %s821 = ssub.s32 %s19, 2
        // Predicated region
        $region69: #{tpu_custom_call.1} parent=67 // pred_check
          %p822 = pneg %p273
        $region70: #{tpu_custom_call.1} parent=67 // pred_check_branch
          %824 = sbr.rel (%p822) target = $region72
        $region71: #{tpu_custom_call.1} parent=67 // pred_region
          %s825 = sand.u32 %s258, 1
          %s826 = scalar_lea.sflag [#allocation3], %s825
          %s827 = sand.u32 %s258, 1
          %s828 = smul.addr %s827, 16
          %s829 = scalar_lea.vmem [#allocation2], %s828
          %831 = dma.done %s826, 256
        $region72: #{tpu_custom_call.1} parent=67 // pred_fallthru
          _
      $region68: #{tpu_custom_call.1} parent=5 // pred_fallthru
        _
    $region6: #{tpu_custom_call.1} parent=1 // loop_footer
      %s23 = sadd.s32 1, %s19
    $region7: #{tpu_custom_call.1} parent=1 // loop_footer_branch
      %18 = sbr.rel target = $region3
    $region8: #{tpu_custom_call.1} parent=1 // loop_exit
      _
    %832 = vsyncpa [#allocation3], 1
    %s833 = scalar_lea.sflag [#allocation3], 1
    %834 = vsyncpa %s833, 1

</llo_original>
